<compile_context>
chip_gen: v6e
topology: v6e:2x2x1
jax: 0.10.0
libtpu: 0.0.40
codegen_flags: <defaults>
</compile_context>

<pallas_src>
import functools

import jax
import jax.numpy as jnp
from jax.experimental import pallas as pl
from jax.experimental.pallas import tpu as pltpu

_BN_EPS = 1e-5
_LANE = 128


def _round_up(x, m):
    return (x + m - 1) // m * m


def _divisor_tile(dim, target, quantum):
    """Largest divisor of `dim` that is a multiple of `quantum` and <= target.

    Falls back to the full extent when `dim` is not quantum-aligned (a block
    equal to the full array dim always satisfies the TPU (8,128) rule)."""
    if dim % quantum:
        return dim
    t = min(target, dim)
    t -= t % quantum
    while dim % t:
        t -= quantum
    return t


def _pick_group(n, hw):
    """Batch-group size g for conv2: fold g images into the matmul M dim so
    M = g*hw is MXU-friendly (>=256 rows when possible) while keeping the
    output row block 8-aligned (or g == n, i.e. a full-extent block)."""
    g = 1
    for cand in range(1, n + 1):
        if n % cand:
            continue
        if (cand * hw) % 8 and cand != n:
            continue
        g = cand
        if cand * hw >= 256:
            break
    return g


# ----------------------------------------------------------------------------
# Kernel 1: fused matmul
#   y = [relu(x*scale + shift)] @ w        (bf16 MXU, f32 accumulation)
#   + per-M-tile per-channel partial sums / sums-of-squares in the epilogue
#     (feeds the *next* BatchNorm's batch statistics -- no extra HBM pass).
# ----------------------------------------------------------------------------
def _mm_kernel(*refs, apply_in_bn):
    if apply_in_bn:
        x_ref, sc_ref, sh_ref, w_ref, y_ref, ps_ref, pq_ref, acc_ref = refs
    else:
        x_ref, w_ref, y_ref, ps_ref, pq_ref, acc_ref = refs

    k = pl.program_id(2)

    @pl.when(k == 0)
    def _():
        acc_ref[...] = jnp.zeros_like(acc_ref)

    xb = x_ref[...]
    if apply_in_bn:                                   # fused BN+ReLU prologue
        xb = xb.astype(jnp.float32) * sc_ref[...] + sh_ref[...]
        xb = jnp.maximum(xb, 0.0)
    xb = xb.astype(jnp.bfloat16)
    acc_ref[...] += jnp.dot(xb, w_ref[...], preferred_element_type=jnp.float32)

    @pl.when(k == pl.num_programs(2) - 1)
    def _():
        acc = acc_ref[...]
        y_ref[...] = acc.astype(y_ref.dtype)
        ps_ref[...] = jnp.sum(acc, axis=0).reshape(ps_ref.shape)
        pq_ref[...] = jnp.sum(acc * acc, axis=0).reshape(pq_ref.shape)


def fused_matmul(x, w, scale=None, shift=None, *,
                 tm_target=256, tn_target=2048, tk_target=512,
                 out_dtype=jnp.bfloat16):
    """(M,K)@(K,N) with optional fused input BN+ReLU and fused output stats.

    tn_target defaults to 2048 so the 1x1-conv matmuls run with nb == 1:
    the BN+ReLU prologue is applied exactly once per x tile."""
    M, K = x.shape
    K2, N = w.shape
    assert K == K2
    tm = _divisor_tile(M, tm_target, 8)
    tn = _divisor_tile(N, tn_target, _LANE)
    tk = _divisor_tile(K, tk_target, _LANE)
    mb, nb, kb = M // tm, N // tn, K // tk
    apply_in_bn = scale is not None

    in_specs = [pl.BlockSpec((tm, tk), lambda i, j, k: (i, k))]
    args = [x]
    if apply_in_bn:
        in_specs += [pl.BlockSpec((1, tk), lambda i, j, k: (0, k)),
                     pl.BlockSpec((1, tk), lambda i, j, k: (0, k))]
        args += [scale, shift]
    in_specs += [pl.BlockSpec((tk, tn), lambda i, j, k: (k, j))]
    args += [w]

    ce = pl.CostEstimate(flops=2 * M * N * K, transcendentals=0,
                         bytes_accessed=2 * (M * K + K * N + M * N))

    y, ps, pq = pl.pallas_call(
        functools.partial(_mm_kernel, apply_in_bn=apply_in_bn),
        out_shape=(jax.ShapeDtypeStruct((M, N), out_dtype),
                   jax.ShapeDtypeStruct((mb, 1, N), jnp.float32),
                   jax.ShapeDtypeStruct((mb, 1, N), jnp.float32)),
        grid_spec=pltpu.PrefetchScalarGridSpec(
            num_scalar_prefetch=0,
            grid=(mb, nb, kb),
            in_specs=in_specs,
            out_specs=(pl.BlockSpec((tm, tn), lambda i, j, k: (i, j)),
                       pl.BlockSpec((1, 1, tn), lambda i, j, k: (i, 0, j)),
                       pl.BlockSpec((1, 1, tn), lambda i, j, k: (i, 0, j))),
            scratch_shapes=[pltpu.VMEM((tm, tn), jnp.float32)]),
        compiler_params=pltpu.CompilerParams(
            dimension_semantics=("parallel", "parallel", "arbitrary")),
        cost_estimate=ce,
    )(*args)
    return y, ps.reshape(mb, N), pq.reshape(mb, N)


# ----------------------------------------------------------------------------
# Kernel 2: 3x3 conv (stride s, pad 1) as 9 shifted accumulating matmuls.
#   * BN1+ReLU is applied ONCE per image group into a zero-haloed bf16 VMEM
#     scratch (the conv's zero padding happens after BN1+ReLU in the
#     reference, so the halo is true zeros -- no per-tap masking needed).
#   * Each tap is a static slice of the scratch + one MXU matmul; the f32
#     accumulator is initialized from tap 0.
#   * BN2 partial statistics are produced in the epilogue.
# Input layout: unpadded parity planes (ss, n, Ho, Wo, C) where plane
#   p = ((ky-1)%s)*s + (kx-1)%s holds y1[:, py::s, px::s, :].
# ----------------------------------------------------------------------------
def _conv3x3_kernel(x_ref, sc_ref, sh_ref, w_ref, y_ref, ps_ref, pq_ref,
                    xs_ref, acc_ref, *, stride, Ho, Wo):
    s = stride
    g = x_ref.shape[1]
    c = x_ref.shape[-1]

    # Hoisted BN1+ReLU + halo build (only when the co-tile index is 0; the
    # co axis is "arbitrary" so this runs before any j > 0 step per group).
    @pl.when(pl.program_id(1) == 0)
    def _():
        xs_ref[...] = jnp.zeros_like(xs_ref)          # zero halo
        z = x_ref[...].astype(jnp.float32) * sc_ref[...] + sh_ref[...]
        xs_ref[:, :, 1:Ho + 1, 1:Wo + 1, :] = (
            jnp.maximum(z, 0.0).astype(xs_ref.dtype))

    def tap(ky, kx):
        py, px = (ky - 1) % s, (kx - 1) % s
        dy, dx = (ky - 1 - py) // s, (kx - 1 - px) // s   # in {-1, 0, 1}
        plane = py * s + px
        z = xs_ref[plane, :, 1 + dy:1 + dy + Ho, 1 + dx:1 + dx + Wo, :]
        return z.reshape(g * Ho * Wo, c)

    acc_ref[...] = jnp.dot(tap(0, 0), w_ref[0],
                           preferred_element_type=jnp.float32)
    for t in range(1, 9):
        ky, kx = divmod(t, 3)
        acc_ref[...] += jnp.dot(tap(ky, kx), w_ref[t],
                                preferred_element_type=jnp.float32)

    acc = acc_ref[...]
    y_ref[...] = acc.astype(y_ref.dtype)
    ps_ref[...] = jnp.sum(acc, axis=0).reshape(ps_ref.shape)
    pq_ref[...] = jnp.sum(acc * acc, axis=0).reshape(pq_ref.shape)


def conv2_3x3(y1_par, scale1, shift1, w2, *, stride, Ho, Wo, g, tn_co):
    ss, n, _, _, c = y1_par.shape
    co = w2.shape[-1]
    assert n % g == 0 and co % tn_co == 0
    ng = n // g
    nco = co // tn_co
    m2 = n * Ho * Wo

    ce = pl.CostEstimate(
        flops=2 * 9 * m2 * c * co, transcendentals=0,
        bytes_accessed=2 * (y1_par.size + w2.size + m2 * co) + 8 * ng * co)

    y2, ps, pq = pl.pallas_call(
        functools.partial(_conv3x3_kernel, stride=stride, Ho=Ho, Wo=Wo),
        out_shape=(jax.ShapeDtypeStruct((m2, co), jnp.bfloat16),
                   jax.ShapeDtypeStruct((ng, 1, co), jnp.float32),
                   jax.ShapeDtypeStruct((ng, 1, co), jnp.float32)),
        grid_spec=pltpu.PrefetchScalarGridSpec(
            num_scalar_prefetch=0,
            grid=(ng, nco),
            in_specs=[pl.BlockSpec((ss, g, Ho, Wo, c),
                                   lambda i, j: (0, i, 0, 0, 0)),
                      pl.BlockSpec((1, c), lambda i, j: (0, 0)),
                      pl.BlockSpec((1, c), lambda i, j: (0, 0)),
                      pl.BlockSpec((9, c, tn_co), lambda i, j: (0, 0, j))],
            out_specs=(pl.BlockSpec((g * Ho * Wo, tn_co), lambda i, j: (i, j)),
                       pl.BlockSpec((1, 1, tn_co), lambda i, j: (i, 0, j)),
                       pl.BlockSpec((1, 1, tn_co), lambda i, j: (i, 0, j))),
            scratch_shapes=[
                pltpu.VMEM((ss, g, Ho + 2, Wo + 2, c), jnp.bfloat16),
                pltpu.VMEM((g * Ho * Wo, tn_co), jnp.float32)]),
        compiler_params=pltpu.CompilerParams(
            dimension_semantics=("parallel", "arbitrary")),
        cost_estimate=ce,
    )(y1_par, scale1, shift1, w2)
    return y2, ps.reshape(ng, co), pq.reshape(ng, co)


# ----------------------------------------------------------------------------
# Kernel 3: fused BN3(y3) + [BN_sc(shortcut) | identity] + add + ReLU (bf16).
# ----------------------------------------------------------------------------
def _residual_kernel(*refs, shortcut_bn):
    if shortcut_bn:
        a_ref, sa_ref, ba_ref, b_ref, sb_ref, bb_ref, o_ref = refs
        short = b_ref[...].astype(jnp.float32) * sb_ref[...] + bb_ref[...]
    else:
        a_ref, sa_ref, ba_ref, b_ref, o_ref = refs
        short = b_ref[...].astype(jnp.float32)        # identity: no dead x*1+0
    main = a_ref[...].astype(jnp.float32) * sa_ref[...] + ba_ref[...]
    o_ref[...] = jnp.maximum(main + short, 0.0).astype(o_ref.dtype)


def fused_residual(y3, sc3, sh3, short, scs=None, shs=None, *, tm_target=256):
    M, C = y3.shape
    tm = _divisor_tile(M, tm_target, 8)
    shortcut_bn = scs is not None
    vec = pl.BlockSpec((1, C), lambda i: (0, 0))
    mat = pl.BlockSpec((tm, C), lambda i: (i, 0))
    in_specs = [mat, vec, vec, mat]
    args = [y3, sc3, sh3, short]
    if shortcut_bn:
        in_specs += [vec, vec]
        args += [scs, shs]
    return pl.pallas_call(
        functools.partial(_residual_kernel, shortcut_bn=shortcut_bn),
        out_shape=jax.ShapeDtypeStruct((M, C), jnp.bfloat16),
        grid_spec=pltpu.PrefetchScalarGridSpec(
            num_scalar_prefetch=0,
            grid=(M // tm,),
            in_specs=in_specs,
            out_specs=pl.BlockSpec((tm, C), lambda i: (i, 0))),
        compiler_params=pltpu.CompilerParams(dimension_semantics=("parallel",)),
    )(*args)


# ----------------------------------------------------------------------------
# Glue: BN scale/shift from fused partial sums, channel padding, forward pass.
# ----------------------------------------------------------------------------
def _bn_scale_shift(psum, psq, m, gamma_p, beta_p):
    # psum/psq: (num_tiles, C) f32 partial sums from a kernel epilogue.
    s = jnp.sum(psum, axis=0)
    sq = jnp.sum(psq, axis=0)
    mean = s / m
    var = sq / m - mean * mean            # biased variance (PyTorch train BN)
    inv = jax.lax.rsqrt(var + _BN_EPS)
    scale = gamma_p * inv
    shift = beta_p - mean * scale
    return scale.reshape(1, -1), shift.reshape(1, -1)


def _pad_lane(a, cp):
    pad = cp - a.shape[-1]
    if pad == 0:
        return a
    cfg = [(0, 0)] * (a.ndim - 1) + [(0, pad)]
    return jnp.pad(a, cfg)


def _pad_mat(w, kp, np_):
    return jnp.pad(w, ((0, kp - w.shape[0]), (0, np_ - w.shape[1])))


def init_params(key, cin, cout, stride):
    cmid = cout // 4
    k1, k2, k3, k4 = jax.random.split(key, 4)

    def conv_w(k, o, i, kh, kw):          # torch layout (O, I, kh, kw)
        fan_in = i * kh * kw
        return jax.random.normal(k, (o, i, kh, kw), jnp.float32) / jnp.sqrt(fan_in)

    p = {
        "w1_t": conv_w(k1, cmid, cin, 1, 1),
        "w2_t": conv_w(k2, cmid, cmid, 3, 3),
        "w3_t": conv_w(k3, cout, cmid, 1, 1),
        "g1": jnp.ones((cmid,), jnp.float32), "b1": jnp.zeros((cmid,), jnp.float32),
        "g2": jnp.ones((cmid,), jnp.float32), "b2": jnp.zeros((cmid,), jnp.float32),
        "g3": jnp.ones((cout,), jnp.float32), "b3": jnp.zeros((cout,), jnp.float32),
    }
    if stride != 1 or cin != cout:
        p["wsc_t"] = conv_w(k4, cout, cin, 1, 1)
        p["gsc"] = jnp.ones((cout,), jnp.float32)
        p["bsc"] = jnp.zeros((cout,), jnp.float32)
    return p


def res_block_forward(x_nchw, p, stride):
    x = jnp.transpose(x_nchw, (0, 2, 3, 1)).astype(jnp.float32)     # NHWC
    n, h, w, cin = x.shape
    cmid = p["w1_t"].shape[0]
    cout = p["w3_t"].shape[0]
    cin_p = _round_up(cin, _LANE)
    cm_p = _round_up(cmid, _LANE)
    co_p = _round_up(cout, _LANE)
    s = stride
    assert s == 1 or (h % s == 0 and w % s == 0), \
        "stride must divide spatial dims (always true for ResNet-50)"
    ho = (h + s - 1) // s
    wo = (w + s - 1) // s
    m1 = n * h * w
    m2 = n * ho * wo

    # padded bf16 activations / weights ; f32 BN params (padded lanes -> 0)
    xp = _pad_lane(x, cin_p).astype(jnp.bfloat16)
    w1 = _pad_mat(p["w1_t"][:, :, 0, 0].T, cin_p, cm_p).astype(jnp.bfloat16)
    w2 = jnp.pad(p["w2_t"].transpose(2, 3, 1, 0).reshape(9, cmid, cmid),
                 ((0, 0), (0, cm_p - cmid), (0, cm_p - cmid))).astype(jnp.bfloat16)
    w3 = _pad_mat(p["w3_t"][:, :, 0, 0].T, cm_p, co_p).astype(jnp.bfloat16)
    g1, b1 = _pad_lane(p["g1"], cm_p), _pad_lane(p["b1"], cm_p)
    g2, b2 = _pad_lane(p["g2"], cm_p), _pad_lane(p["b2"], cm_p)
    g3, b3 = _pad_lane(p["g3"], co_p), _pad_lane(p["b3"], co_p)

    # ---- conv1 (1x1) with BN1 stats fused in the epilogue -------------------
    y1, ps1, pq1 = fused_matmul(xp.reshape(m1, cin_p), w1)
    sc1, sh1 = _bn_scale_shift(ps1, pq1, m1, g1, b1)

    # ---- conv2 (3x3, stride, pad=1): BN1+ReLU + halo built in-kernel --------
    if s == 1:
        y1_par = y1.reshape(1, n, h, w, cm_p)          # free reshape, no glue
    else:
        # parity relayout only (no spatial pad pass); plane p = py*s + px
        y1_par = (y1.reshape(n, ho, s, wo, s, cm_p)
                    .transpose(2, 4, 0, 1, 3, 5)
                    .reshape(s * s, n, ho, wo, cm_p))
    g_grp = _pick_group(n, ho * wo)
    tn_co = _divisor_tile(cm_p, 512, _LANE)
    y2, ps2, pq2 = conv2_3x3(y1_par, sc1, sh1, w2, stride=s,
                             Ho=ho, Wo=wo, g=g_grp, tn_co=tn_co)
    sc2, sh2 = _bn_scale_shift(ps2, pq2, m2, g2, b2)

    # ---- conv3 (1x1): BN2+ReLU fused prologue, BN3 stats fused epilogue -----
    y3, ps3, pq3 = fused_matmul(y2, w3, sc2, sh2)
    sc3, sh3 = _bn_scale_shift(ps3, pq3, m2, g3, b3)

    # ---- shortcut ------------------------------------------------------------
    if "wsc_t" in p:
        wsc = _pad_mat(p["wsc_t"][:, :, 0, 0].T, cin_p, co_p).astype(jnp.bfloat16)
        gsc, bsc = _pad_lane(p["gsc"], co_p), _pad_lane(p["bsc"], co_p)
        # TODO(synk): fold this strided subsample into the shortcut matmul's
        # index_map instead of a separate XLA strided-copy.
        xs = xp[:, ::s, ::s, :].reshape(m2, cin_p)
        ysc, pss, pqs = fused_matmul(xs, wsc)
        scs, shs = _bn_scale_shift(pss, pqs, m2, gsc, bsc)
        out = fused_residual(y3, sc3, sh3, ysc, scs, shs)
    else:
        # identity shortcut: add the original f32 input (matches reference)
        out = fused_residual(y3, sc3, sh3, _pad_lane(x, co_p).reshape(m2, co_p))

    out = out[:, :cout].reshape(n, ho, wo, cout)
    return jnp.transpose(out, (0, 3, 1, 2)).astype(jnp.float32)     # NCHW


# ----------------------------------------------------------------------------
# Pure-JAX f32 reference (NCHW) for verification
# ----------------------------------------------------------------------------
def _conv_ref(x, w, stride=1, padding=0):
    return jax.lax.conv_general_dilated(
        x, w, (stride, stride), [(padding, padding)] * 2,
        dimension_numbers=("NCHW", "OIHW", "NCHW"))


def _bn_ref(x, gamma, beta):
    mean = jnp.mean(x, axis=(0, 2, 3), keepdims=True)
    var = jnp.var(x, axis=(0, 2, 3), keepdims=True)
    return ((x - mean) / jnp.sqrt(var + _BN_EPS)
            * gamma.reshape(1, -1, 1, 1) + beta.reshape(1, -1, 1, 1))


def res_block_ref(x, p, stride):
    y = jax.nn.relu(_bn_ref(_conv_ref(x, p["w1_t"]), p["g1"], p["b1"]))
    y = jax.nn.relu(_bn_ref(_conv_ref(y, p["w2_t"], stride, 1), p["g2"], p["b2"]))
    y = _bn_ref(_conv_ref(y, p["w3_t"]), p["g3"], p["b3"])
    if "wsc_t" in p:
        s = _bn_ref(_conv_ref(x, p["wsc_t"], stride), p["gsc"], p["bsc"])
    else:
        s = x
    return jax.nn.relu(y + s)


# ----------------------------------------------------------------------------
if __name__ == "__main__":
    key = jax.random.PRNGKey(0)

    # config 1: strided block with projection shortcut
    kx, kp, kx2, kp2 = jax.random.split(key, 4)
    N, Cin, H, W = 2, 4, 16, 16
    Cout, stride = 8, 2
    x = jax.random.normal(kx, (N, Cin, H, W), jnp.float32)
    params = init_params(kp, Cin, Cout, stride)
    out = jax.block_until_ready(res_block_forward(x, params, stride))
    ref = res_block_ref(x, params, stride)
    assert out.shape == ref.shape, (out.shape, ref.shape)
    # bf16 activation/weight storage vs. an f32 reference -> relaxed tolerance
    assert jnp.allclose(out, ref, atol=5e-2, rtol=2e-2), \
        float(jnp.max(jnp.abs(out - ref)))

    # config 2: stride-1 block with identity shortcut
    Cin2 = Cout2 = 8
    x2 = jax.random.normal(kx2, (N, Cin2, H, W), jnp.float32)
    params2 = init_params(kp2, Cin2, Cout2, 1)
    out2 = jax.block_until_ready(res_block_forward(x2, params2, 1))
    ref2 = res_block_ref(x2, params2, 1)
    assert out2.shape == ref2.shape, (out2.shape, ref2.shape)
    assert jnp.allclose(out2, ref2, atol=5e-2, rtol=2e-2), \
        float(jnp.max(jnp.abs(out2 - ref2)))

    print("KERNEL_OK")
</pallas_src>

<mosaic_0001>
module attributes {stable_mosaic.version = 11 : i64} {
  func.func @_mm_kernel(%arg0: i32, %arg1: i32, %arg2: i32, %arg3: memref<256x128xbf16, #tpu.memory_space<vmem>>, %arg4: memref<128x128xbf16, #tpu.memory_space<vmem>>, %arg5: memref<256x128xbf16, #tpu.memory_space<vmem>>, %arg6: memref<1x1x128xf32, #tpu.memory_space<vmem>>, %arg7: memref<1x1x128xf32, #tpu.memory_space<vmem>>, %arg8: memref<256x128xf32, #tpu.memory_space<vmem>>) attributes {dimension_semantics = [#tpu.dimension_semantics<parallel>, #tpu.dimension_semantics<parallel>, #tpu.dimension_semantics<arbitrary>], iteration_bounds = array<i64: 2, 1, 1>, scalar_prefetch = 0 : i64, scratch_operands = 1 : i64, tpu.core_type = #tpu.core_type<tc>, window_params = [{transform_indices = @transform_0, window_bounds = array<i64: 256, 128>}, {transform_indices = @transform_1, window_bounds = array<i64: 128, 128>}, {transform_indices = @transform_2, window_bounds = array<i64: 256, 128>}, {transform_indices = @transform_3, window_bounds = array<i64: 1, 1, 128>}, {transform_indices = @transform_4, window_bounds = array<i64: 1, 1, 128>}]} {
    %c0_i32 = arith.constant 0 : i32
    %0 = arith.cmpi eq, %arg2, %c0_i32 : i32
    %1 = arith.extui %0 : i1 to i32
    %c0_i32_0 = arith.constant 0 : i32
    %2 = arith.cmpi ne, %1, %c0_i32_0 : i32
    scf.if %2 {
      %cst_10 = arith.constant 0.000000e+00 : f32
      %12 = vector.broadcast %cst_10 : f32 to vector<256x128xf32>
      %c0_11 = arith.constant 0 : index
      %c0_12 = arith.constant 0 : index
      %13 = vector.load %arg8[%c0_11, %c0_12] : memref<256x128xf32, #tpu.memory_space<vmem>>, vector<256x128xf32>
      tpu.vector_store %arg8[%c0_11, %c0_12], %12 {strides = array<i32>} : memref<256x128xf32, #tpu.memory_space<vmem>>, vector<256x128xf32>,
    } else {
    }
    %c0 = arith.constant 0 : index
    %c0_1 = arith.constant 0 : index
    %3 = vector.load %arg3[%c0, %c0_1] : memref<256x128xbf16, #tpu.memory_space<vmem>>, vector<256x128xbf16>
    %c0_2 = arith.constant 0 : index
    %c0_3 = arith.constant 0 : index
    %4 = vector.load %arg8[%c0_2, %c0_3] : memref<256x128xf32, #tpu.memory_space<vmem>>, vector<256x128xf32>
    %c0_4 = arith.constant 0 : index
    %c0_5 = arith.constant 0 : index
    %5 = vector.load %arg4[%c0_4, %c0_5] : memref<128x128xbf16, #tpu.memory_space<vmem>>, vector<128x128xbf16>
    %cst = arith.constant dense<0.000000e+00> : vector<256x128xf32>
    %6 = tpu.matmul %3, %5, %cst {dimension_numbers = #tpu.dot_dimension_numbers<[1], [0], [0], [1], [0, 0, 1, 1], [], []>} : vector<256x128xbf16>, vector<128x128xbf16>, vector<256x128xf32> -> vector<256x128xf32>
    %7 = arith.addf %4, %6 : vector<256x128xf32>
    %c0_6 = arith.constant 0 : index
    %c0_7 = arith.constant 0 : index
    %8 = vector.load %arg8[%c0_6, %c0_7] : memref<256x128xf32, #tpu.memory_space<vmem>>, vector<256x128xf32>
    tpu.vector_store %arg8[%c0_6, %c0_7], %7 {strides = array<i32>} : memref<256x128xf32, #tpu.memory_space<vmem>>, vector<256x128xf32>,
    %c0_i32_8 = arith.constant 0 : i32
    %9 = arith.cmpi eq, %arg2, %c0_i32_8 : i32
    %10 = arith.extui %9 : i1 to i32
    %c0_i32_9 = arith.constant 0 : i32
    %11 = arith.cmpi ne, %10, %c0_i32_9 : i32
    scf.if %11 {
      %c0_10 = arith.constant 0 : index
      %c0_11 = arith.constant 0 : index
      %12 = vector.load %arg8[%c0_10, %c0_11] : memref<256x128xf32, #tpu.memory_space<vmem>>, vector<256x128xf32>
      %13 = arith.truncf %12 : vector<256x128xf32> to vector<256x128xbf16>
      %c0_12 = arith.constant 0 : index
      %c0_13 = arith.constant 0 : index
      %14 = vector.load %arg5[%c0_12, %c0_13] : memref<256x128xbf16, #tpu.memory_space<vmem>>, vector<256x128xbf16>
      tpu.vector_store %arg5[%c0_12, %c0_13], %13 {strides = array<i32>} : memref<256x128xbf16, #tpu.memory_space<vmem>>, vector<256x128xbf16>,
      %cst_14 = arith.constant dense<0.000000e+00> : vector<128xf32>
      %15 = vector.multi_reduction <add>, %12, %cst_14 [0] : vector<256x128xf32> to vector<128xf32>
      %16 = vector.shape_cast %15 : vector<128xf32> to vector<1x1x128xf32>
      %c0_15 = arith.constant 0 : index
      %c0_16 = arith.constant 0 : index
      %c0_17 = arith.constant 0 : index
      %17 = vector.load %arg6[%c0_15, %c0_16, %c0_17] : memref<1x1x128xf32, #tpu.memory_space<vmem>>, vector<1x1x128xf32>
      tpu.vector_store %arg6[%c0_15, %c0_16, %c0_17], %16 {strides = array<i32>} : memref<1x1x128xf32, #tpu.memory_space<vmem>>, vector<1x1x128xf32>,
      %18 = arith.mulf %12, %12 : vector<256x128xf32>
      %cst_18 = arith.constant dense<0.000000e+00> : vector<128xf32>
      %19 = vector.multi_reduction <add>, %18, %cst_18 [0] : vector<256x128xf32> to vector<128xf32>
      %20 = vector.shape_cast %19 : vector<128xf32> to vector<1x1x128xf32>
      %c0_19 = arith.constant 0 : index
      %c0_20 = arith.constant 0 : index
      %c0_21 = arith.constant 0 : index
      %21 = vector.load %arg7[%c0_19, %c0_20, %c0_21] : memref<1x1x128xf32, #tpu.memory_space<vmem>>, vector<1x1x128xf32>
      tpu.vector_store %arg7[%c0_19, %c0_20, %c0_21], %20 {strides = array<i32>} : memref<1x1x128xf32, #tpu.memory_space<vmem>>, vector<1x1x128xf32>,
    } else {
    }
    return
  }
  func.func @transform_0(%arg0: i32, %arg1: i32, %arg2: i32) -> (i32, i32) {
    %c0_i32 = arith.constant 0 : i32
    return %arg0, %arg2 : i32, i32
  }
  func.func @transform_1(%arg0: i32, %arg1: i32, %arg2: i32) -> (i32, i32) {
    %c0_i32 = arith.constant 0 : i32
    return %arg2, %arg1 : i32, i32
  }
  func.func @transform_2(%arg0: i32, %arg1: i32, %arg2: i32) -> (i32, i32) {
    %c0_i32 = arith.constant 0 : i32
    return %arg0, %arg1 : i32, i32
  }
  func.func @transform_3(%arg0: i32, %arg1: i32, %arg2: i32) -> (i32, i32, i32) {
    %c0_i32 = arith.constant 0 : i32
    %c0_i32_0 = arith.constant 0 : i32
    return %arg0, %c0_i32, %arg1 : i32, i32, i32
  }
  func.func @transform_4(%arg0: i32, %arg1: i32, %arg2: i32) -> (i32, i32, i32) {
    %c0_i32 = arith.constant 0 : i32
    %c0_i32_0 = arith.constant 0 : i32
    return %arg0, %c0_i32, %arg1 : i32, i32, i32
  }
}

</mosaic_0001>

<llo_original>
// kernel: tpu_custom_call.1
$region0: #{tpu_custom_call.1}
  #allocation0 [shape = 'u32[]', space=smem, size = 0x4, offset = 0x4, fixed_abs, tag = 'smem constant byte address 0x4 - core index']
  #allocation1 [shape = 'u32[144,128]{1,0:T(1,128)}', space=vmem, size = 0x12000, scoped, tag = 'internal scratch']
  #allocation2 [shape = 'f32[256,128]{1,0:T(8,128)}', space=vmem, size = 0x20000, scoped, tag = 'scratch operand']
  %s0 = inlined_call_operand.hbm [shape: bf16[512,128], index: 0, kind: input, shape index: {}]
  %s1 = inlined_call_operand.hbm [shape: bf16[128,128], index: 1, kind: input, shape index: {}]
  %s2 = inlined_call_operand.hbm [shape: bf16[512,128], index: 2, kind: output, shape index: {0}]
  %s3 = inlined_call_operand.hbm [shape: f32[2,1,128], index: 3, kind: output, shape index: {1}]
  %s4 = inlined_call_operand.hbm [shape: f32[2,1,128], index: 4, kind: output, shape index: {2}]
  %5 = xla_tuple %s2, %s3, %s4
  %s6 = sld [smem:[#allocation0]]
  $region73: #{tpu_custom_call.1} parent=0
    _
  %s8 = ssub.s32 1, %s6
  %s9 = scalar_select 0, %s8, %s6
  $region1: #{tpu_custom_call.1} parent=0
    #allocation3 [shape = 'u8[131072]{0}', space=vmem, size = 0x20000, scoped, tag = 'input window, operand 0']
    #allocation4 [shape = 's32[2]{0}', space=sflag, size = 0x8, scoped, tag = 'scoped memory for tpu_custom_call.1']
    #allocation5 [shape = 's32[2]{0}', space=sflag, size = 0x8, scoped, tag = 'scoped memory for tpu_custom_call.1']
    #allocation6 [shape = 'u8[32768]{0}', space=vmem, size = 0x8000, scoped, tag = 'input window, operand 1, single buffered']
    #allocation7 [shape = 's32[1]{0}', space=sflag, size = 0x4, scoped, tag = 'scoped memory for tpu_custom_call.1']
    #allocation8 [shape = 'u8[131072]{0}', space=vmem, size = 0x20000, scoped, tag = 'output window, operand 0']
    #allocation9 [shape = 'u8[1024]{0}', space=vmem, size = 0x400, scoped, tag = 'output window, operand 1']
    #allocation10 [shape = 's32[2]{0}', space=sflag, size = 0x8, scoped, tag = 'scoped memory for tpu_custom_call.1']
    #allocation11 [shape = 'u8[1024]{0}', space=vmem, size = 0x400, scoped, tag = 'output window, operand 2']
    %10 = vsyncpa [#allocation4], 0
    %s11 = scalar_lea.sflag [#allocation4], 1
    %12 = vsyncpa %s11, 0
    %13 = vsyncpa [#allocation7], 0
    %14 = vsyncpa [#allocation5], 0
    %s15 = scalar_lea.sflag [#allocation5], 1
    %16 = vsyncpa %s15, 0
    %17 = vsyncpa [#allocation10], 0
    %s18 = scalar_lea.sflag [#allocation10], 1
    %19 = vsyncpa %s18, 0
    loop: start=0, step=1, limit=4
    $region2: #{tpu_custom_call.1} parent=1 // loop_pre_header
      _
    $region3: #{tpu_custom_call.1} parent=1 // loop_header
      %s21 = sphi 0, %s25
      %p22 = scmp.ge.s32.totalorder %s21, 4
      %s28 = sphi 0, %s47
      %s29 = sphi 0, %s43
      %s30 = sphi 0, %s39
      %s31 = sphi 0, %s28
      %s32 = sphi 0, %s29
      %s33 = sphi 0, %s30
      %s34 = sphi 0, %s31
      %s35 = sphi 0, %s32
      %s36 = sphi 0, %s33
      %s52 = sphi 0, %s54
      %s55 = sphi 0, %s52
      %s56 = sphi 0, %s55
      %s72 = sphi 0, %s56
      %s80 = sphi 0, %s82
      %s83 = sphi 0, %s80
      %s84 = sphi 0, %s83
      %s100 = sphi 0, %s84
      %s108 = sphi 0, %s110
      %s111 = sphi 0, %s108
      %s112 = sphi 0, %s111
      %s128 = sphi 0, %s112
      %s136 = sphi 0, %s138
      %s139 = sphi 0, %s136
      %s140 = sphi 0, %s139
      %s156 = sphi 0, %s140
      %s164 = sphi 0, %s166
      %s167 = sphi 0, %s164
      %s168 = sphi 0, %s167
      %s184 = sphi 0, %s168
    $region4: #{tpu_custom_call.1} parent=1 // loop_header_branch
      %24 = sbr.rel (%p22) target = $region8
    $region5: #{tpu_custom_call.1} parent=1 // loop_body
      %s26 = ssub.s32 %s21, 1
      %s27 = ssub.s32 %s21, 2
      %s37 = sadd.s32 1, %s30
      %p38 = scmp.ge.s32.totalorder %s37, 1
      %s39 = scalar_select %p38, 0, %s37
      %s40 = sadd.s32 1, %s29
      %s41 = scalar_select %p38, %s40, %s29
      %p42 = scmp.ge.s32.totalorder %s41, 1
      %s43 = scalar_select %p42, 0, %s41
      %s44 = sadd.s32 1, %s28
      %s45 = scalar_select %p42, %s44, %s28
      %p46 = scmp.ge.s32.totalorder %s45, 2
      %s47 = scalar_select %p46, 0, %s45
      %s48 = ssub.s32 %s28, %s47
      %s49 = ssub.s32 %s30, %s39
      %s50 = sor.u32 %s48, %s49
      %p51 = scmp.eq.s32.totalorder %s50, 0
      %s53 = sadd.s32 %s52, 1
      %s54 = scalar_select %p51, %s52, %s53
      %p57 = pneg %p51
      %p58 = scmp.eq.s32.totalorder %s21, 1
      %p59 = por %p57, %p58
      %p60 = scmp.ne.s32.totalorder %s52, %s55
      %p61 = scmp.eq.s32.totalorder %s21, 0
      %p62 = por %p60, %p61
      %p63 = scmp.ne.s32.totalorder %s52, %s55
      %p64 = scmp.eq.s32.totalorder %s26, 1
      %p65 = por %p63, %p64
      %p66 = scmp.ne.s32.totalorder %s55, %s56
      %p67 = scmp.eq.s32.totalorder %s26, 0
      %p68 = por %p66, %p67
      %p69 = scmp.ne.s32.totalorder %s55, %s56
      %p70 = scmp.eq.s32.totalorder %s27, 1
      %p71 = por %p69, %p70
      %p73 = scmp.ne.s32.totalorder %s56, %s72
      %p74 = scmp.eq.s32.totalorder %s27, 0
      %p75 = por %p73, %p74
      %s76 = ssub.s32 %s30, %s39
      %s77 = ssub.s32 %s29, %s43
      %s78 = sor.u32 %s76, %s77
      %p79 = scmp.eq.s32.totalorder %s78, 0
      %s81 = sadd.s32 %s80, 1
      %s82 = scalar_select %p79, %s80, %s81
      %p85 = pneg %p79
      %p86 = scmp.eq.s32.totalorder %s21, 1
      %p87 = por %p85, %p86
      %p88 = scmp.ne.s32.totalorder %s80, %s83
      %p89 = scmp.eq.s32.totalorder %s21, 0
      %p90 = por %p88, %p89
      %p91 = scmp.ne.s32.totalorder %s80, %s83
      %p92 = scmp.eq.s32.totalorder %s26, 1
      %p93 = por %p91, %p92
      %p94 = scmp.ne.s32.totalorder %s83, %s84
      %p95 = scmp.eq.s32.totalorder %s26, 0
      %p96 = por %p94, %p95
      %p97 = scmp.ne.s32.totalorder %s83, %s84
      %p98 = scmp.eq.s32.totalorder %s27, 1
      %p99 = por %p97, %p98
      %p101 = scmp.ne.s32.totalorder %s84, %s100
      %p102 = scmp.eq.s32.totalorder %s27, 0
      %p103 = por %p101, %p102
      %s104 = ssub.s32 %s28, %s47
      %s105 = ssub.s32 %s29, %s43
      %s106 = sor.u32 %s104, %s105
      %p107 = scmp.eq.s32.totalorder %s106, 0
      %s109 = sadd.s32 %s108, 1
      %s110 = scalar_select %p107, %s108, %s109
      %p113 = pneg %p107
      %p114 = scmp.eq.s32.totalorder %s21, 1
      %p115 = por %p113, %p114
      %p116 = scmp.ne.s32.totalorder %s108, %s111
      %p117 = scmp.eq.s32.totalorder %s21, 0
      %p118 = por %p116, %p117
      %p119 = scmp.ne.s32.totalorder %s108, %s111
      %p120 = scmp.eq.s32.totalorder %s26, 1
      %p121 = por %p119, %p120
      %p122 = scmp.ne.s32.totalorder %s111, %s112
      %p123 = scmp.eq.s32.totalorder %s26, 0
      %p124 = por %p122, %p123
      %p125 = scmp.ne.s32.totalorder %s111, %s112
      %p126 = scmp.eq.s32.totalorder %s27, 1
      %p127 = por %p125, %p126
      %p129 = scmp.ne.s32.totalorder %s112, %s128
      %p130 = scmp.eq.s32.totalorder %s27, 0
      %p131 = por %p129, %p130
      %s132 = ssub.s32 %s28, %s47
      %s133 = ssub.s32 %s29, %s43
      %s134 = sor.u32 %s132, %s133
      %p135 = scmp.eq.s32.totalorder %s134, 0
      %s137 = sadd.s32 %s136, 1
      %s138 = scalar_select %p135, %s136, %s137
      %p141 = pneg %p135
      %p142 = scmp.eq.s32.totalorder %s21, 1
      %p143 = por %p141, %p142
      %p144 = scmp.ne.s32.totalorder %s136, %s139
      %p145 = scmp.eq.s32.totalorder %s21, 0
      %p146 = por %p144, %p145
      %p147 = scmp.ne.s32.totalorder %s136, %s139
      %p148 = scmp.eq.s32.totalorder %s26, 1
      %p149 = por %p147, %p148
      %p150 = scmp.ne.s32.totalorder %s139, %s140
      %p151 = scmp.eq.s32.totalorder %s26, 0
      %p152 = por %p150, %p151
      %p153 = scmp.ne.s32.totalorder %s139, %s140
      %p154 = scmp.eq.s32.totalorder %s27, 1
      %p155 = por %p153, %p154
      %p157 = scmp.ne.s32.totalorder %s140, %s156
      %p158 = scmp.eq.s32.totalorder %s27, 0
      %p159 = por %p157, %p158
      %s160 = ssub.s32 %s28, %s47
      %s161 = ssub.s32 %s29, %s43
      %s162 = sor.u32 %s160, %s161
      %p163 = scmp.eq.s32.totalorder %s162, 0
      %s165 = sadd.s32 %s164, 1
      %s166 = scalar_select %p163, %s164, %s165
      %p169 = pneg %p163
      %p170 = scmp.eq.s32.totalorder %s21, 1
      %p171 = por %p169, %p170
      %p172 = scmp.ne.s32.totalorder %s164, %s167
      %p173 = scmp.eq.s32.totalorder %s21, 0
      %p174 = por %p172, %p173
      %p175 = scmp.ne.s32.totalorder %s164, %s167
      %p176 = scmp.eq.s32.totalorder %s26, 1
      %p177 = por %p175, %p176
      %p178 = scmp.ne.s32.totalorder %s167, %s168
      %p179 = scmp.eq.s32.totalorder %s26, 0
      %p180 = por %p178, %p179
      %p181 = scmp.ne.s32.totalorder %s167, %s168
      %p182 = scmp.eq.s32.totalorder %s27, 1
      %p183 = por %p181, %p182
      %p185 = scmp.ne.s32.totalorder %s168, %s184
      %p186 = scmp.eq.s32.totalorder %s27, 0
      %p187 = por %p185, %p186
      %p188 = scmp.le.s32.totalorder 1, %s21
      %p189 = scmp.lt.s32.totalorder %s21, 3
      %p190 = pnand %p188, %p189
      %p191 = pneg %p190
      // Predicated region
      $region9: #{tpu_custom_call.1} parent=5 // pred_check
        _
      $region10: #{tpu_custom_call.1} parent=5 // pred_check_branch
        %193 = sbr.rel (%p190) target = $region12
      $region11: #{tpu_custom_call.1} parent=5 // pred_region
        %s194 = ssub.s32 %s21, 1
        // Predicated region
        $region13: #{tpu_custom_call.1} parent=11 // pred_check
          %p195 = pneg %p96
        $region14: #{tpu_custom_call.1} parent=11 // pred_check_branch
          %197 = sbr.rel (%p195) target = $region16
        $region15: #{tpu_custom_call.1} parent=11 // pred_region
          %s198 = smul.u32 16, %s33
          %s200 = ssub.s32 1024, 1024
          %201 = vsyncadd [#allocation7], %s200
          %s202 = sadd.s32 %s32, %s198
          %s203 = smul.addr %s202, 64
          %s204 = scalar_lea.hbm %s1, %s203
          %s205 = sshll.u32 [#allocation6], 4
          %s206 = int_to_ptr.vmem [resolvable:$true] %s205
          %211 = dma.hbm_to_vmem [thread:$0]  %s204, 1024, %s206, [#allocation7], 64, 64, 4
        $region16: #{tpu_custom_call.1} parent=11 // pred_fallthru
          _
      $region12: #{tpu_custom_call.1} parent=5 // pred_fallthru
        _
      %p212 = scmp.lt.s32.totalorder %s21, 2
      // Predicated region
      $region17: #{tpu_custom_call.1} parent=5 // pred_check
        %p213 = pneg %p212
      $region18: #{tpu_custom_call.1} parent=5 // pred_check_branch
        %215 = sbr.rel (%p213) target = $region20
      $region19: #{tpu_custom_call.1} parent=5 // pred_region
        // Predicated region
        $region21: #{tpu_custom_call.1} parent=19 // pred_check
          %p216 = pneg %p62
        $region22: #{tpu_custom_call.1} parent=19 // pred_check_branch
          %218 = sbr.rel (%p216) target = $region24
        $region23: #{tpu_custom_call.1} parent=19 // pred_region
          %s219 = sand.u32 %s52, 1
          %s220 = scalar_lea.sflag [#allocation4], %s219
          %s221 = sand.u32 %s52, 1
          %s222 = smul.addr %s221, 128
          %s223 = scalar_lea.vmem [#allocation3], %s222
          %s224 = smul.u32 32, %s28
          %s226 = ssub.s32 2048, 2048
          %227 = vsyncadd %s220, %s226
          %s228 = sadd.s32 %s30, %s224
          %s229 = smul.addr %s228, 64
          %s230 = scalar_lea.hbm %s0, %s229
          %s231 = sshll.u32 %s223, 4
          %s232 = int_to_ptr.vmem [resolvable:$true] %s231
          %237 = dma.hbm_to_vmem [thread:$0]  %s230, 2048, %s232, %s220, 64, 64, 4
        $region24: #{tpu_custom_call.1} parent=19 // pred_fallthru
          _
      $region20: #{tpu_custom_call.1} parent=5 // pred_fallthru
        _
      %p238 = scmp.le.s32.totalorder 1, %s21
      %p239 = scmp.lt.s32.totalorder %s21, 3
      %p240 = pnand %p238, %p239
      %p241 = pneg %p240
      // Predicated region
      $region25: #{tpu_custom_call.1} parent=5 // pred_check
        _
      $region26: #{tpu_custom_call.1} parent=5 // pred_check_branch
        %243 = sbr.rel (%p240) target = $region28
      $region27: #{tpu_custom_call.1} parent=5 // pred_region
        %s244 = ssub.s32 %s21, 1
        %s245 = sand.u32 %s55, 1
        %s246 = scalar_lea.sflag [#allocation4], %s245
        %s247 = sand.u32 %s55, 1
        %s248 = smul.addr %s247, 128
        %s249 = scalar_lea.vmem [#allocation3], %s248
        // Predicated region
        $region29: #{tpu_custom_call.1} parent=27 // pred_check
          %p250 = pneg %p68
        $region30: #{tpu_custom_call.1} parent=27 // pred_check_branch
          %252 = sbr.rel (%p250) target = $region32
        $region31: #{tpu_custom_call.1} parent=27 // pred_region
          %253 = dma.done %s246, 2048
        $region32: #{tpu_custom_call.1} parent=27 // pred_fallthru
          _
        // Predicated region
        $region33: #{tpu_custom_call.1} parent=27 // pred_check
          %p254 = pneg %p96
        $region34: #{tpu_custom_call.1} parent=27 // pred_check_branch
          %256 = sbr.rel (%p254) target = $region36
        $region35: #{tpu_custom_call.1} parent=27 // pred_region
          %257 = dma.done [#allocation7], 1024
        $region36: #{tpu_custom_call.1} parent=27 // pred_fallthru
          _
        %s258 = sand.u32 %s55, 1
        %s259 = scalar_lea.sflag [#allocation4], %s258
        %s260 = sand.u32 %s55, 1
        %s261 = smul.addr %s260, 128
        %s262 = scalar_lea.vmem [#allocation3], %s261
        %p263 = pneg %p68
        %p264 = pneg %p65
        %p265 = pneg %p96
        %p266 = pneg %p93
        %p267 = pneg %p124
        %p268 = pneg %p121
        %s269 = sand.u32 %s111, 1
        %s270 = scalar_lea.sflag [#allocation5], %s269
        %s271 = sand.u32 %s111, 1
        %s272 = smul.addr %s271, 128
        %s273 = scalar_lea.vmem [#allocation8], %s272
        %p274 = pneg %p152
        %p275 = pneg %p149
        %s276 = sand.u32 %s26, 1
        %s277 = scalar_lea.sflag [#allocation10], %s276
        %s278 = sand.u32 %s139, 1
        %s279 = scalar_lea.vmem [#allocation9], %s278
        %p280 = pneg %p180
        %p281 = pneg %p177
        %s282 = sand.u32 %s26, 1
        %s283 = scalar_lea.sflag [#allocation10], %s282
        %s284 = sand.u32 %s167, 1
        %s285 = scalar_lea.vmem [#allocation11], %s284
        %s286 = smul.u32 32, %s31
        %s287 = smul.u32 16, %s33
        %s288 = smul.u32 32, %s31
        %p290 = scmp.eq.s32.totalorder %s33, 0
        // Predicated region
        $region37: #{tpu_custom_call.1} parent=27 // pred_check
          %p291 = pneg %p290
        $region38: #{tpu_custom_call.1} parent=27 // pred_check_branch
          %293 = sbr.rel (%p291) target = $region40
        $region39: #{tpu_custom_call.1} parent=27 // pred_region
          %294 = vst [vmem:[#allocation2] sm:$0xff] 0.0
          %295 = vst [vmem:[#allocation2 + $0x8] sm:$0xff] 0.0
          %296 = vst [vmem:[#allocation2 + $0x10] sm:$0xff] 0.0
          %297 = vst [vmem:[#allocation2 + $0x18] sm:$0xff] 0.0
          %298 = vst [vmem:[#allocation2 + $0x20] sm:$0xff] 0.0
          %299 = vst [vmem:[#allocation2 + $0x28] sm:$0xff] 0.0
          %300 = vst [vmem:[#allocation2 + $0x30] sm:$0xff] 0.0
          %301 = vst [vmem:[#allocation2 + $0x38] sm:$0xff] 0.0
          %302 = vst [vmem:[#allocation2 + $0x40] sm:$0xff] 0.0
          %303 = vst [vmem:[#allocation2 + $0x48] sm:$0xff] 0.0
          %304 = vst [vmem:[#allocation2 + $0x50] sm:$0xff] 0.0
          %305 = vst [vmem:[#allocation2 + $0x58] sm:$0xff] 0.0
          %306 = vst [vmem:[#allocation2 + $0x60] sm:$0xff] 0.0
          %307 = vst [vmem:[#allocation2 + $0x68] sm:$0xff] 0.0
          %308 = vst [vmem:[#allocation2 + $0x70] sm:$0xff] 0.0
          %309 = vst [vmem:[#allocation2 + $0x78] sm:$0xff] 0.0
          %310 = vst [vmem:[#allocation2 + $0x80] sm:$0xff] 0.0
          %311 = vst [vmem:[#allocation2 + $0x88] sm:$0xff] 0.0
          %312 = vst [vmem:[#allocation2 + $0x90] sm:$0xff] 0.0
          %313 = vst [vmem:[#allocation2 + $0x98] sm:$0xff] 0.0
          %314 = vst [vmem:[#allocation2 + $0xa0] sm:$0xff] 0.0
          %315 = vst [vmem:[#allocation2 + $0xa8] sm:$0xff] 0.0
          %316 = vst [vmem:[#allocation2 + $0xb0] sm:$0xff] 0.0
          %317 = vst [vmem:[#allocation2 + $0xb8] sm:$0xff] 0.0
          %318 = vst [vmem:[#allocation2 + $0xc0] sm:$0xff] 0.0
          %319 = vst [vmem:[#allocation2 + $0xc8] sm:$0xff] 0.0
          %320 = vst [vmem:[#allocation2 + $0xd0] sm:$0xff] 0.0
          %321 = vst [vmem:[#allocation2 + $0xd8] sm:$0xff] 0.0
          %322 = vst [vmem:[#allocation2 + $0xe0] sm:$0xff] 0.0
          %323 = vst [vmem:[#allocation2 + $0xe8] sm:$0xff] 0.0
          %324 = vst [vmem:[#allocation2 + $0xf0] sm:$0xff] 0.0
          %325 = vst [vmem:[#allocation2 + $0xf8] sm:$0xff] 0.0
        $region40: #{tpu_custom_call.1} parent=27 // pred_fallthru
          _
        %v326 = vld [vmem:[%s249] sm:$0xf]
        %v327 = vld [vmem:[%s249 + $0x4] sm:$0xf]
        %v328 = vld [vmem:[%s249 + $0x8] sm:$0xf]
        %v329 = vld [vmem:[%s249 + $0xc] sm:$0xf]
        %v330 = vld [vmem:[%s249 + $0x10] sm:$0xf]
        %v331 = vld [vmem:[%s249 + $0x14] sm:$0xf]
        %v332 = vld [vmem:[%s249 + $0x18] sm:$0xf]
        %v333 = vld [vmem:[%s249 + $0x1c] sm:$0xf]
        %v334 = vld [vmem:[%s249 + $0x20] sm:$0xf]
        %v335 = vld [vmem:[%s249 + $0x24] sm:$0xf]
        %v336 = vld [vmem:[%s249 + $0x28] sm:$0xf]
        %v337 = vld [vmem:[%s249 + $0x2c] sm:$0xf]
        %v338 = vld [vmem:[%s249 + $0x30] sm:$0xf]
        %v339 = vld [vmem:[%s249 + $0x34] sm:$0xf]
        %v340 = vld [vmem:[%s249 + $0x38] sm:$0xf]
        %v341 = vld [vmem:[%s249 + $0x3c] sm:$0xf]
        %v342 = vld [vmem:[%s249 + $0x40] sm:$0xf]
        %v343 = vld [vmem:[%s249 + $0x44] sm:$0xf]
        %v344 = vld [vmem:[%s249 + $0x48] sm:$0xf]
        %v345 = vld [vmem:[%s249 + $0x4c] sm:$0xf]
        %v346 = vld [vmem:[%s249 + $0x50] sm:$0xf]
        %v347 = vld [vmem:[%s249 + $0x54] sm:$0xf]
        %v348 = vld [vmem:[%s249 + $0x58] sm:$0xf]
        %v349 = vld [vmem:[%s249 + $0x5c] sm:$0xf]
        %v350 = vld [vmem:[%s249 + $0x60] sm:$0xf]
        %v351 = vld [vmem:[%s249 + $0x64] sm:$0xf]
        %v352 = vld [vmem:[%s249 + $0x68] sm:$0xf]
        %v353 = vld [vmem:[%s249 + $0x6c] sm:$0xf]
        %v354 = vld [vmem:[%s249 + $0x70] sm:$0xf]
        %v355 = vld [vmem:[%s249 + $0x74] sm:$0xf]
        %v356 = vld [vmem:[%s249 + $0x78] sm:$0xf]
        %v357 = vld [vmem:[%s249 + $0x7c] sm:$0xf]
        %v358 = vld [vmem:[#allocation2] sm:$0xff]
        %v359 = vld [vmem:[#allocation2 + $0x8] sm:$0xff]
        %v360 = vld [vmem:[#allocation2 + $0x10] sm:$0xff]
        %v361 = vld [vmem:[#allocation2 + $0x18] sm:$0xff]
        %v362 = vld [vmem:[#allocation2 + $0x20] sm:$0xff]
        %v363 = vld [vmem:[#allocation2 + $0x28] sm:$0xff]
        %v364 = vld [vmem:[#allocation2 + $0x30] sm:$0xff]
        %v365 = vld [vmem:[#allocation2 + $0x38] sm:$0xff]
        %v366 = vld [vmem:[#allocation2 + $0x40] sm:$0xff]
        %v367 = vld [vmem:[#allocation2 + $0x48] sm:$0xff]
        %v368 = vld [vmem:[#allocation2 + $0x50] sm:$0xff]
        %v369 = vld [vmem:[#allocation2 + $0x58] sm:$0xff]
        %v370 = vld [vmem:[#allocation2 + $0x60] sm:$0xff]
        %v371 = vld [vmem:[#allocation2 + $0x68] sm:$0xff]
        %v372 = vld [vmem:[#allocation2 + $0x70] sm:$0xff]
        %v373 = vld [vmem:[#allocation2 + $0x78] sm:$0xff]
        %v374 = vld [vmem:[#allocation2 + $0x80] sm:$0xff]
        %v375 = vld [vmem:[#allocation2 + $0x88] sm:$0xff]
        %v376 = vld [vmem:[#allocation2 + $0x90] sm:$0xff]
        %v377 = vld [vmem:[#allocation2 + $0x98] sm:$0xff]
        %v378 = vld [vmem:[#allocation2 + $0xa0] sm:$0xff]
        %v379 = vld [vmem:[#allocation2 + $0xa8] sm:$0xff]
        %v380 = vld [vmem:[#allocation2 + $0xb0] sm:$0xff]
        %v381 = vld [vmem:[#allocation2 + $0xb8] sm:$0xff]
        %v382 = vld [vmem:[#allocation2 + $0xc0] sm:$0xff]
        %v383 = vld [vmem:[#allocation2 + $0xc8] sm:$0xff]
        %v384 = vld [vmem:[#allocation2 + $0xd0] sm:$0xff]
        %v385 = vld [vmem:[#allocation2 + $0xd8] sm:$0xff]
        %v386 = vld [vmem:[#allocation2 + $0xe0] sm:$0xff]
        %v387 = vld [vmem:[#allocation2 + $0xe8] sm:$0xff]
        %v388 = vld [vmem:[#allocation2 + $0xf0] sm:$0xff]
        %v389 = vld [vmem:[#allocation2 + $0xf8] sm:$0xff]
        %v390 = vld [vmem:[#allocation6] sm:$0xf]
        %v391 = vld [vmem:[#allocation6 + $0x4] sm:$0xf]
        %v392 = vld [vmem:[#allocation6 + $0x8] sm:$0xf]
        %v393 = vld [vmem:[#allocation6 + $0xc] sm:$0xf]
        %v394 = vld [vmem:[#allocation6 + $0x10] sm:$0xf]
        %v395 = vld [vmem:[#allocation6 + $0x14] sm:$0xf]
        %v396 = vld [vmem:[#allocation6 + $0x18] sm:$0xf]
        %v397 = vld [vmem:[#allocation6 + $0x1c] sm:$0xf]
        %v398 = vld [vmem:[#allocation6 + $0x20] sm:$0xf]
        %v399 = vld [vmem:[#allocation6 + $0x24] sm:$0xf]
        %v400 = vld [vmem:[#allocation6 + $0x28] sm:$0xf]
        %v401 = vld [vmem:[#allocation6 + $0x2c] sm:$0xf]
        %v402 = vld [vmem:[#allocation6 + $0x30] sm:$0xf]
        %v403 = vld [vmem:[#allocation6 + $0x34] sm:$0xf]
        %v404 = vld [vmem:[#allocation6 + $0x38] sm:$0xf]
        %v405 = vld [vmem:[#allocation6 + $0x3c] sm:$0xf]
        %v438 = vunpack.c.l.b16 %v326
        %v439 = vunpack.c.l.b16 %v327
        %v440 = vunpack.c.l.b16 %v328
        %v441 = vunpack.c.l.b16 %v329
        %v442 = vunpack.c.l.b16 %v330
        %v443 = vunpack.c.l.b16 %v331
        %v444 = vunpack.c.l.b16 %v332
        %v445 = vunpack.c.l.b16 %v333
        %v446 = vunpack.c.l.b16 %v334
        %v447 = vunpack.c.l.b16 %v335
        %v448 = vunpack.c.l.b16 %v336
        %v449 = vunpack.c.l.b16 %v337
        %v450 = vunpack.c.l.b16 %v338
        %v451 = vunpack.c.l.b16 %v339
        %v452 = vunpack.c.l.b16 %v340
        %v453 = vunpack.c.l.b16 %v341
        %v454 = vunpack.c.l.b16 %v342
        %v455 = vunpack.c.l.b16 %v343
        %v456 = vunpack.c.l.b16 %v344
        %v457 = vunpack.c.l.b16 %v345
        %v458 = vunpack.c.l.b16 %v346
        %v459 = vunpack.c.l.b16 %v347
        %v460 = vunpack.c.l.b16 %v348
        %v461 = vunpack.c.l.b16 %v349
        %v462 = vunpack.c.l.b16 %v350
        %v463 = vunpack.c.l.b16 %v351
        %v464 = vunpack.c.l.b16 %v352
        %v465 = vunpack.c.l.b16 %v353
        %v466 = vunpack.c.l.b16 %v354
        %v467 = vunpack.c.l.b16 %v355
        %v468 = vunpack.c.l.b16 %v356
        %v469 = vunpack.c.l.b16 %v357
        %v470 = vpack.c.b16 %v439, %v438
        %v471 = vpack.c.b16 %v441, %v440
        %v472 = vpack.c.b16 %v443, %v442
        %v473 = vpack.c.b16 %v445, %v444
        %v474 = vpack.c.b16 %v447, %v446
        %v475 = vpack.c.b16 %v449, %v448
        %v476 = vpack.c.b16 %v451, %v450
        %v477 = vpack.c.b16 %v453, %v452
        %v478 = vpack.c.b16 %v455, %v454
        %v479 = vpack.c.b16 %v457, %v456
        %v480 = vpack.c.b16 %v459, %v458
        %v481 = vpack.c.b16 %v461, %v460
        %v482 = vpack.c.b16 %v463, %v462
        %v483 = vpack.c.b16 %v465, %v464
        %v484 = vpack.c.b16 %v467, %v466
        %v485 = vpack.c.b16 %v469, %v468
        %v518 = vunpack.c.l.b16 %v390
        %v519 = vunpack.c.l.b16 %v391
        %v520 = vunpack.c.l.b16 %v392
        %v521 = vunpack.c.l.b16 %v393
        %v522 = vunpack.c.l.b16 %v394
        %v523 = vunpack.c.l.b16 %v395
        %v524 = vunpack.c.l.b16 %v396
        %v525 = vunpack.c.l.b16 %v397
        %v526 = vunpack.c.l.b16 %v398
        %v527 = vunpack.c.l.b16 %v399
        %v528 = vunpack.c.l.b16 %v400
        %v529 = vunpack.c.l.b16 %v401
        %v530 = vunpack.c.l.b16 %v402
        %v531 = vunpack.c.l.b16 %v403
        %v532 = vunpack.c.l.b16 %v404
        %v533 = vunpack.c.l.b16 %v405
        %v534 = vpack.c.b16 %v519, %v518
        %v535 = vpack.c.b16 %v521, %v520
        %v536 = vpack.c.b16 %v523, %v522
        %v537 = vpack.c.b16 %v525, %v524
        %v538 = vpack.c.b16 %v527, %v526
        %v539 = vpack.c.b16 %v529, %v528
        %v540 = vpack.c.b16 %v531, %v530
        %v541 = vpack.c.b16 %v533, %v532
        %550 = vmatprep.subr.bf16.mxu0 0
        %551 = vmatpush1.bf16.msra.mxu0 %v541
        %552 = vmatprep.subr.bf16.mxu0 0
        %553 = vmatpush1.bf16.msra.mxu0 %v540
        %554 = vmatprep.subr.bf16.mxu0 0
        %555 = vmatpush1.bf16.msra.mxu0 %v539
        %556 = vmatprep.subr.bf16.mxu0 0
        %557 = vmatpush1.bf16.msra.mxu0 %v538
        %558 = vmatprep.subr.bf16.mxu0 0
        %559 = vmatpush1.bf16.msra.mxu0 %v537
        %560 = vmatprep.subr.bf16.mxu0 0
        %561 = vmatpush1.bf16.msra.mxu0 %v536
        %562 = vmatprep.subr.bf16.mxu0 0
        %563 = vmatpush1.bf16.msra.mxu0 %v535
        %564 = vmatprep.subr.bf16.mxu0 0
        %565 = vmatpush1.bf16.msra.mxu0 %v534
        %566 = vmatprep.subr.bf16.mxu0 0
        %567 = vmatpush2.bf16.msra.mxu0 0
        %568 = vmatprep.subr.bf16.mxu0 0
        %569 = vmatpush2.bf16.msra.mxu0 0
        %570 = vmatprep.subr.bf16.mxu0 0
        %571 = vmatpush2.bf16.msra.mxu0 0
        %572 = vmatprep.subr.bf16.mxu0 0
        %573 = vmatpush2.bf16.msra.mxu0 0
        %574 = vmatprep.subr.bf16.mxu0 0
        %575 = vmatpush2.bf16.msra.mxu0 0
        %576 = vmatprep.subr.bf16.mxu0 0
        %577 = vmatpush2.bf16.msra.mxu0 0
        %578 = vmatprep.subr.bf16.mxu0 0
        %579 = vmatpush2.bf16.msra.mxu0 0
        %580 = vmatprep.subr.bf16.mxu0 0
        %581 = vmatpush2.bf16.msra.mxu0 0
        %582 = vmatprep.mubr.bf16.mxu0 0
        %583 = vmatmul.mubr.bf16.gmra.mxu0 %v470
        %v584 = vpop.f32.mrf.mxu0
        %v585 = vadd.f32 0.0, %v584
        %v586 = vpop.f32.mrf.mxu0
        %v587 = vpop.f32.mrf.mxu0
        %v588 = vadd.f32 0.0, %v587
        %v589 = vpop.f32.mrf.mxu0
        %590 = vmatprep.mubr.bf16.mxu0 0
        %591 = vmatmul.mubr.bf16.gmra.mxu0 %v471
        %v592 = vpop.f32.mrf.mxu0
        %v593 = vadd.f32 0.0, %v592
        %v594 = vpop.f32.mrf.mxu0
        %v595 = vpop.f32.mrf.mxu0
        %v596 = vadd.f32 0.0, %v595
        %v597 = vpop.f32.mrf.mxu0
        %598 = vmatprep.mubr.bf16.mxu0 0
        %599 = vmatmul.mubr.bf16.gmra.mxu0 %v472
        %v600 = vpop.f32.mrf.mxu0
        %v601 = vadd.f32 0.0, %v600
        %v602 = vpop.f32.mrf.mxu0
        %v603 = vpop.f32.mrf.mxu0
        %v604 = vadd.f32 0.0, %v603
        %v605 = vpop.f32.mrf.mxu0
        %606 = vmatprep.mubr.bf16.mxu0 0
        %607 = vmatmul.mubr.bf16.gmra.mxu0 %v473
        %v608 = vpop.f32.mrf.mxu0
        %v609 = vadd.f32 0.0, %v608
        %v610 = vpop.f32.mrf.mxu0
        %v611 = vpop.f32.mrf.mxu0
        %v612 = vadd.f32 0.0, %v611
        %v613 = vpop.f32.mrf.mxu0
        %614 = vmatprep.mubr.bf16.mxu0 0
        %615 = vmatmul.mubr.bf16.gmra.mxu0 %v474
        %v616 = vpop.f32.mrf.mxu0
        %v617 = vadd.f32 0.0, %v616
        %v618 = vpop.f32.mrf.mxu0
        %v619 = vpop.f32.mrf.mxu0
        %v620 = vadd.f32 0.0, %v619
        %v621 = vpop.f32.mrf.mxu0
        %622 = vmatprep.mubr.bf16.mxu0 0
        %623 = vmatmul.mubr.bf16.gmra.mxu0 %v475
        %v624 = vpop.f32.mrf.mxu0
        %v625 = vadd.f32 0.0, %v624
        %v626 = vpop.f32.mrf.mxu0
        %v627 = vpop.f32.mrf.mxu0
        %v628 = vadd.f32 0.0, %v627
        %v629 = vpop.f32.mrf.mxu0
        %630 = vmatprep.mubr.bf16.mxu0 0
        %631 = vmatmul.mubr.bf16.gmra.mxu0 %v476
        %v632 = vpop.f32.mrf.mxu0
        %v633 = vadd.f32 0.0, %v632
        %v634 = vpop.f32.mrf.mxu0
        %v635 = vpop.f32.mrf.mxu0
        %v636 = vadd.f32 0.0, %v635
        %v637 = vpop.f32.mrf.mxu0
        %638 = vmatprep.mubr.bf16.mxu0 0
        %639 = vmatmul.mubr.bf16.gmra.mxu0 %v477
        %v640 = vpop.f32.mrf.mxu0
        %v641 = vadd.f32 0.0, %v640
        %v642 = vpop.f32.mrf.mxu0
        %v643 = vpop.f32.mrf.mxu0
        %v644 = vadd.f32 0.0, %v643
        %v645 = vpop.f32.mrf.mxu0
        %646 = vmatprep.mubr.bf16.mxu0 0
        %647 = vmatmul.mubr.bf16.gmra.mxu0 %v478
        %v648 = vpop.f32.mrf.mxu0
        %v649 = vadd.f32 0.0, %v648
        %v650 = vpop.f32.mrf.mxu0
        %v651 = vpop.f32.mrf.mxu0
        %v652 = vadd.f32 0.0, %v651
        %v653 = vpop.f32.mrf.mxu0
        %654 = vmatprep.mubr.bf16.mxu0 0
        %655 = vmatmul.mubr.bf16.gmra.mxu0 %v479
        %v656 = vpop.f32.mrf.mxu0
        %v657 = vadd.f32 0.0, %v656
        %v658 = vpop.f32.mrf.mxu0
        %v659 = vpop.f32.mrf.mxu0
        %v660 = vadd.f32 0.0, %v659
        %v661 = vpop.f32.mrf.mxu0
        %662 = vmatprep.mubr.bf16.mxu0 0
        %663 = vmatmul.mubr.bf16.gmra.mxu0 %v480
        %v664 = vpop.f32.mrf.mxu0
        %v665 = vadd.f32 0.0, %v664
        %v666 = vpop.f32.mrf.mxu0
        %v667 = vpop.f32.mrf.mxu0
        %v668 = vadd.f32 0.0, %v667
        %v669 = vpop.f32.mrf.mxu0
        %670 = vmatprep.mubr.bf16.mxu0 0
        %671 = vmatmul.mubr.bf16.gmra.mxu0 %v481
        %v672 = vpop.f32.mrf.mxu0
        %v673 = vadd.f32 0.0, %v672
        %v674 = vpop.f32.mrf.mxu0
        %v675 = vpop.f32.mrf.mxu0
        %v676 = vadd.f32 0.0, %v675
        %v677 = vpop.f32.mrf.mxu0
        %678 = vmatprep.mubr.bf16.mxu0 0
        %679 = vmatmul.mubr.bf16.gmra.mxu0 %v482
        %v680 = vpop.f32.mrf.mxu0
        %v681 = vadd.f32 0.0, %v680
        %v682 = vpop.f32.mrf.mxu0
        %v683 = vpop.f32.mrf.mxu0
        %v684 = vadd.f32 0.0, %v683
        %v685 = vpop.f32.mrf.mxu0
        %686 = vmatprep.mubr.bf16.mxu0 0
        %687 = vmatmul.mubr.bf16.gmra.mxu0 %v483
        %v688 = vpop.f32.mrf.mxu0
        %v689 = vadd.f32 0.0, %v688
        %v690 = vpop.f32.mrf.mxu0
        %v691 = vpop.f32.mrf.mxu0
        %v692 = vadd.f32 0.0, %v691
        %v693 = vpop.f32.mrf.mxu0
        %694 = vmatprep.mubr.bf16.mxu0 0
        %695 = vmatmul.mubr.bf16.gmra.mxu0 %v484
        %v696 = vpop.f32.mrf.mxu0
        %v697 = vadd.f32 0.0, %v696
        %v698 = vpop.f32.mrf.mxu0
        %v699 = vpop.f32.mrf.mxu0
        %v700 = vadd.f32 0.0, %v699
        %v701 = vpop.f32.mrf.mxu0
        %702 = vmatprep.mubr.bf16.mxu0 0
        %703 = vmatmul.mubr.bf16.gmra.mxu0 %v485
        %v704 = vpop.f32.mrf.mxu0
        %v705 = vadd.f32 0.0, %v704
        %v706 = vpop.f32.mrf.mxu0
        %v707 = vpop.f32.mrf.mxu0
        %v708 = vadd.f32 0.0, %v707
        %v709 = vpop.f32.mrf.mxu0
        %710 = vdwg.mxu0
        %v711 = vadd.f32 %v358, %v585
        %v712 = vadd.f32 %v359, %v588
        %v713 = vadd.f32 %v360, %v593
        %v714 = vadd.f32 %v361, %v596
        %v715 = vadd.f32 %v362, %v601
        %v716 = vadd.f32 %v363, %v604
        %v717 = vadd.f32 %v364, %v609
        %v718 = vadd.f32 %v365, %v612
        %v719 = vadd.f32 %v366, %v617
        %v720 = vadd.f32 %v367, %v620
        %v721 = vadd.f32 %v368, %v625
        %v722 = vadd.f32 %v369, %v628
        %v723 = vadd.f32 %v370, %v633
        %v724 = vadd.f32 %v371, %v636
        %v725 = vadd.f32 %v372, %v641
        %v726 = vadd.f32 %v373, %v644
        %v727 = vadd.f32 %v374, %v649
        %v728 = vadd.f32 %v375, %v652
        %v729 = vadd.f32 %v376, %v657
        %v730 = vadd.f32 %v377, %v660
        %v731 = vadd.f32 %v378, %v665
        %v732 = vadd.f32 %v379, %v668
        %v733 = vadd.f32 %v380, %v673
        %v734 = vadd.f32 %v381, %v676
        %v735 = vadd.f32 %v382, %v681
        %v736 = vadd.f32 %v383, %v684
        %v737 = vadd.f32 %v384, %v689
        %v738 = vadd.f32 %v385, %v692
        %v739 = vadd.f32 %v386, %v697
        %v740 = vadd.f32 %v387, %v700
        %v741 = vadd.f32 %v388, %v705
        %v742 = vadd.f32 %v389, %v708
        %743 = vst [vmem:[#allocation2] sm:$0xff] %v711
        %744 = vst [vmem:[#allocation2 + $0x8] sm:$0xff] %v712
        %745 = vst [vmem:[#allocation2 + $0x10] sm:$0xff] %v713
        %746 = vst [vmem:[#allocation2 + $0x18] sm:$0xff] %v714
        %747 = vst [vmem:[#allocation2 + $0x20] sm:$0xff] %v715
        %748 = vst [vmem:[#allocation2 + $0x28] sm:$0xff] %v716
        %749 = vst [vmem:[#allocation2 + $0x30] sm:$0xff] %v717
        %750 = vst [vmem:[#allocation2 + $0x38] sm:$0xff] %v718
        %751 = vst [vmem:[#allocation2 + $0x40] sm:$0xff] %v719
        %752 = vst [vmem:[#allocation2 + $0x48] sm:$0xff] %v720
        %753 = vst [vmem:[#allocation2 + $0x50] sm:$0xff] %v721
        %754 = vst [vmem:[#allocation2 + $0x58] sm:$0xff] %v722
        %755 = vst [vmem:[#allocation2 + $0x60] sm:$0xff] %v723
        %756 = vst [vmem:[#allocation2 + $0x68] sm:$0xff] %v724
        %757 = vst [vmem:[#allocation2 + $0x70] sm:$0xff] %v725
        %758 = vst [vmem:[#allocation2 + $0x78] sm:$0xff] %v726
        %759 = vst [vmem:[#allocation2 + $0x80] sm:$0xff] %v727
        %760 = vst [vmem:[#allocation2 + $0x88] sm:$0xff] %v728
        %761 = vst [vmem:[#allocation2 + $0x90] sm:$0xff] %v729
        %762 = vst [vmem:[#allocation2 + $0x98] sm:$0xff] %v730
        %763 = vst [vmem:[#allocation2 + $0xa0] sm:$0xff] %v731
        %764 = vst [vmem:[#allocation2 + $0xa8] sm:$0xff] %v732
        %765 = vst [vmem:[#allocation2 + $0xb0] sm:$0xff] %v733
        %766 = vst [vmem:[#allocation2 + $0xb8] sm:$0xff] %v734
        %767 = vst [vmem:[#allocation2 + $0xc0] sm:$0xff] %v735
        %768 = vst [vmem:[#allocation2 + $0xc8] sm:$0xff] %v736
        %769 = vst [vmem:[#allocation2 + $0xd0] sm:$0xff] %v737
        %770 = vst [vmem:[#allocation2 + $0xd8] sm:$0xff] %v738
        %771 = vst [vmem:[#allocation2 + $0xe0] sm:$0xff] %v739
        %772 = vst [vmem:[#allocation2 + $0xe8] sm:$0xff] %v740
        %773 = vst [vmem:[#allocation2 + $0xf0] sm:$0xff] %v741
        %774 = vst [vmem:[#allocation2 + $0xf8] sm:$0xff] %v742
        // Predicated region
        $region41: #{tpu_custom_call.1} parent=27 // pred_check
          %p775 = pneg %p290
        $region42: #{tpu_custom_call.1} parent=27 // pred_check_branch
          %777 = sbr.rel (%p775) target = $region44
        $region43: #{tpu_custom_call.1} parent=27 // pred_region
          %v778 = vld [vmem:[#allocation2] sm:$0xff]
          %v779 = vld [vmem:[#allocation2 + $0x8] sm:$0xff]
          %v780 = vld [vmem:[#allocation2 + $0x10] sm:$0xff]
          %v781 = vld [vmem:[#allocation2 + $0x18] sm:$0xff]
          %v782 = vld [vmem:[#allocation2 + $0x20] sm:$0xff]
          %v783 = vld [vmem:[#allocation2 + $0x28] sm:$0xff]
          %v784 = vld [vmem:[#allocation2 + $0x30] sm:$0xff]
          %v785 = vld [vmem:[#allocation2 + $0x38] sm:$0xff]
          %v786 = vld [vmem:[#allocation2 + $0x40] sm:$0xff]
          %v787 = vld [vmem:[#allocation2 + $0x48] sm:$0xff]
          %v788 = vld [vmem:[#allocation2 + $0x50] sm:$0xff]
          %v789 = vld [vmem:[#allocation2 + $0x58] sm:$0xff]
          %v790 = vld [vmem:[#allocation2 + $0x60] sm:$0xff]
          %v791 = vld [vmem:[#allocation2 + $0x68] sm:$0xff]
          %v792 = vld [vmem:[#allocation2 + $0x70] sm:$0xff]
          %v793 = vld [vmem:[#allocation2 + $0x78] sm:$0xff]
          %v794 = vld [vmem:[#allocation2 + $0x80] sm:$0xff]
          %v795 = vld [vmem:[#allocation2 + $0x88] sm:$0xff]
          %v796 = vld [vmem:[#allocation2 + $0x90] sm:$0xff]
          %v797 = vld [vmem:[#allocation2 + $0x98] sm:$0xff]
          %v798 = vld [vmem:[#allocation2 + $0xa0] sm:$0xff]
          %v799 = vld [vmem:[#allocation2 + $0xa8] sm:$0xff]
          %v800 = vld [vmem:[#allocation2 + $0xb0] sm:$0xff]
          %v801 = vld [vmem:[#allocation2 + $0xb8] sm:$0xff]
          %v802 = vld [vmem:[#allocation2 + $0xc0] sm:$0xff]
          %v803 = vld [vmem:[#allocation2 + $0xc8] sm:$0xff]
          %v804 = vld [vmem:[#allocation2 + $0xd0] sm:$0xff]
          %v805 = vld [vmem:[#allocation2 + $0xd8] sm:$0xff]
          %v806 = vld [vmem:[#allocation2 + $0xe0] sm:$0xff]
          %v807 = vld [vmem:[#allocation2 + $0xe8] sm:$0xff]
          %v808 = vld [vmem:[#allocation2 + $0xf0] sm:$0xff]
          %v809 = vld [vmem:[#allocation2 + $0xf8] sm:$0xff]
          %v810 = vpack.c.bf16 %v779, %v778
          %v811 = vpack.c.bf16 %v781, %v780
          %v812 = vpack.c.bf16 %v783, %v782
          %v813 = vpack.c.bf16 %v785, %v784
          %v814 = vpack.c.bf16 %v787, %v786
          %v815 = vpack.c.bf16 %v789, %v788
          %v816 = vpack.c.bf16 %v791, %v790
          %v817 = vpack.c.bf16 %v793, %v792
          %v818 = vpack.c.bf16 %v795, %v794
          %v819 = vpack.c.bf16 %v797, %v796
          %v820 = vpack.c.bf16 %v799, %v798
          %v821 = vpack.c.bf16 %v801, %v800
          %v822 = vpack.c.bf16 %v803, %v802
          %v823 = vpack.c.bf16 %v805, %v804
          %v824 = vpack.c.bf16 %v807, %v806
          %v825 = vpack.c.bf16 %v809, %v808
          %v842 = vunpack.c.l.b16 %v810
          %v843 = vunpack.c.h.b16 %v810
          %v844 = vunpack.c.l.b16 %v811
          %v845 = vunpack.c.h.b16 %v811
          %v846 = vunpack.c.l.b16 %v812
          %v847 = vunpack.c.h.b16 %v812
          %v848 = vunpack.c.l.b16 %v813
          %v849 = vunpack.c.h.b16 %v813
          %v850 = vunpack.c.l.b16 %v814
          %v851 = vunpack.c.h.b16 %v814
          %v852 = vunpack.c.l.b16 %v815
          %v853 = vunpack.c.h.b16 %v815
          %v854 = vunpack.c.l.b16 %v816
          %v855 = vunpack.c.h.b16 %v816
          %v856 = vunpack.c.l.b16 %v817
          %v857 = vunpack.c.h.b16 %v817
          %v858 = vunpack.c.l.b16 %v818
          %v859 = vunpack.c.h.b16 %v818
          %v860 = vunpack.c.l.b16 %v819
          %v861 = vunpack.c.h.b16 %v819
          %v862 = vunpack.c.l.b16 %v820
          %v863 = vunpack.c.h.b16 %v820
          %v864 = vunpack.c.l.b16 %v821
          %v865 = vunpack.c.h.b16 %v821
          %v866 = vunpack.c.l.b16 %v822
          %v867 = vunpack.c.h.b16 %v822
          %v868 = vunpack.c.l.b16 %v823
          %v869 = vunpack.c.h.b16 %v823
          %v870 = vunpack.c.l.b16 %v824
          %v871 = vunpack.c.h.b16 %v824
          %v872 = vunpack.c.l.b16 %v825
          %v873 = vunpack.c.h.b16 %v825
          %v874 = vpack.c.b16 %v842, %v842
          %v875 = vpack.c.b16 %v843, %v843
          %v876 = vpack.c.b16 %v844, %v844
          %v877 = vpack.c.b16 %v845, %v845
          %v878 = vpack.c.b16 %v846, %v846
          %v879 = vpack.c.b16 %v847, %v847
          %v880 = vpack.c.b16 %v848, %v848
          %v881 = vpack.c.b16 %v849, %v849
          %v882 = vpack.c.b16 %v850, %v850
          %v883 = vpack.c.b16 %v851, %v851
          %v884 = vpack.c.b16 %v852, %v852
          %v885 = vpack.c.b16 %v853, %v853
          %v886 = vpack.c.b16 %v854, %v854
          %v887 = vpack.c.b16 %v855, %v855
          %v888 = vpack.c.b16 %v856, %v856
          %v889 = vpack.c.b16 %v857, %v857
          %v890 = vpack.c.b16 %v858, %v858
          %v891 = vpack.c.b16 %v859, %v859
          %v892 = vpack.c.b16 %v860, %v860
          %v893 = vpack.c.b16 %v861, %v861
          %v894 = vpack.c.b16 %v862, %v862
          %v895 = vpack.c.b16 %v863, %v863
          %v896 = vpack.c.b16 %v864, %v864
          %v897 = vpack.c.b16 %v865, %v865
          %v898 = vpack.c.b16 %v866, %v866
          %v899 = vpack.c.b16 %v867, %v867
          %v900 = vpack.c.b16 %v868, %v868
          %v901 = vpack.c.b16 %v869, %v869
          %v902 = vpack.c.b16 %v870, %v870
          %v903 = vpack.c.b16 %v871, %v871
          %v904 = vpack.c.b16 %v872, %v872
          %v905 = vpack.c.b16 %v873, %v873
          %938 = vst [vmem:[%s273] sm:$0xf] %v874
          %939 = vst [vmem:[%s273 + $0x4] sm:$0xf] %v875
          %940 = vst [vmem:[%s273 + $0x8] sm:$0xf] %v876
          %941 = vst [vmem:[%s273 + $0xc] sm:$0xf] %v877
          %942 = vst [vmem:[%s273 + $0x10] sm:$0xf] %v878
          %943 = vst [vmem:[%s273 + $0x14] sm:$0xf] %v879
          %944 = vst [vmem:[%s273 + $0x18] sm:$0xf] %v880
          %945 = vst [vmem:[%s273 + $0x1c] sm:$0xf] %v881
          %946 = vst [vmem:[%s273 + $0x20] sm:$0xf] %v882
          %947 = vst [vmem:[%s273 + $0x24] sm:$0xf] %v883
          %948 = vst [vmem:[%s273 + $0x28] sm:$0xf] %v884
          %949 = vst [vmem:[%s273 + $0x2c] sm:$0xf] %v885
          %950 = vst [vmem:[%s273 + $0x30] sm:$0xf] %v886
          %951 = vst [vmem:[%s273 + $0x34] sm:$0xf] %v887
          %952 = vst [vmem:[%s273 + $0x38] sm:$0xf] %v888
          %953 = vst [vmem:[%s273 + $0x3c] sm:$0xf] %v889
          %954 = vst [vmem:[%s273 + $0x40] sm:$0xf] %v890
          %955 = vst [vmem:[%s273 + $0x44] sm:$0xf] %v891
          %956 = vst [vmem:[%s273 + $0x48] sm:$0xf] %v892
          %957 = vst [vmem:[%s273 + $0x4c] sm:$0xf] %v893
          %958 = vst [vmem:[%s273 + $0x50] sm:$0xf] %v894
          %959 = vst [vmem:[%s273 + $0x54] sm:$0xf] %v895
          %960 = vst [vmem:[%s273 + $0x58] sm:$0xf] %v896
          %961 = vst [vmem:[%s273 + $0x5c] sm:$0xf] %v897
          %962 = vst [vmem:[%s273 + $0x60] sm:$0xf] %v898
          %963 = vst [vmem:[%s273 + $0x64] sm:$0xf] %v899
          %964 = vst [vmem:[%s273 + $0x68] sm:$0xf] %v900
          %965 = vst [vmem:[%s273 + $0x6c] sm:$0xf] %v901
          %966 = vst [vmem:[%s273 + $0x70] sm:$0xf] %v902
          %967 = vst [vmem:[%s273 + $0x74] sm:$0xf] %v903
          %968 = vst [vmem:[%s273 + $0x78] sm:$0xf] %v904
          %969 = vst [vmem:[%s273 + $0x7c] sm:$0xf] %v905
          %v970 = vadd.f32 %v778, %v779
          %v971 = vadd.f32 %v970, %v780
          %v972 = vadd.f32 %v971, %v781
          %v973 = vadd.f32 %v972, %v782
          %v974 = vadd.f32 %v973, %v783
          %v975 = vadd.f32 %v974, %v784
          %v976 = vadd.f32 %v975, %v785
          %v977 = vadd.f32 %v976, %v786
          %v978 = vadd.f32 %v977, %v787
          %v979 = vadd.f32 %v978, %v788
          %v980 = vadd.f32 %v979, %v789
          %v981 = vadd.f32 %v980, %v790
          %v982 = vadd.f32 %v981, %v791
          %v983 = vadd.f32 %v982, %v792
          %v984 = vadd.f32 %v983, %v793
          %v985 = vadd.f32 %v984, %v794
          %v986 = vadd.f32 %v985, %v795
          %v987 = vadd.f32 %v986, %v796
          %v988 = vadd.f32 %v987, %v797
          %v989 = vadd.f32 %v988, %v798
          %v990 = vadd.f32 %v989, %v799
          %v991 = vadd.f32 %v990, %v800
          %v992 = vadd.f32 %v991, %v801
          %v993 = vadd.f32 %v992, %v802
          %v994 = vadd.f32 %v993, %v803
          %v995 = vadd.f32 %v994, %v804
          %v996 = vadd.f32 %v995, %v805
          %v997 = vadd.f32 %v996, %v806
          %v998 = vadd.f32 %v997, %v807
          %v999 = vadd.f32 %v998, %v808
          %v1000 = vadd.f32 %v999, %v809
          %v1001 = vrot.slane %v1000, 4
          %v1002 = vadd.f32 %v1000, %v1001
          %v1003 = vrot.slane %v1002, 2
          %v1004 = vadd.f32 %v1002, %v1003
          %v1005 = vrot.slane %v1004, 1
          %v1006 = vadd.f32 %v1004, %v1005
          %1007 = vst [vmem:[%s279] sm:$0x1] %v1006
          %v1008 = vmul.f32 %v778, %v778
          %v1009 = vmul.f32 %v779, %v779
          %v1010 = vmul.f32 %v780, %v780
          %v1011 = vmul.f32 %v781, %v781
          %v1012 = vmul.f32 %v782, %v782
          %v1013 = vmul.f32 %v783, %v783
          %v1014 = vmul.f32 %v784, %v784
          %v1015 = vmul.f32 %v785, %v785
          %v1016 = vmul.f32 %v786, %v786
          %v1017 = vmul.f32 %v787, %v787
          %v1018 = vmul.f32 %v788, %v788
          %v1019 = vmul.f32 %v789, %v789
          %v1020 = vmul.f32 %v790, %v790
          %v1021 = vmul.f32 %v791, %v791
          %v1022 = vmul.f32 %v792, %v792
          %v1023 = vmul.f32 %v793, %v793
          %v1024 = vmul.f32 %v794, %v794
          %v1025 = vmul.f32 %v795, %v795
          %v1026 = vmul.f32 %v796, %v796
          %v1027 = vmul.f32 %v797, %v797
          %v1028 = vmul.f32 %v798, %v798
          %v1029 = vmul.f32 %v799, %v799
          %v1030 = vmul.f32 %v800, %v800
          %v1031 = vmul.f32 %v801, %v801
          %v1032 = vmul.f32 %v802, %v802
          %v1033 = vmul.f32 %v803, %v803
          %v1034 = vmul.f32 %v804, %v804
          %v1035 = vmul.f32 %v805, %v805
          %v1036 = vmul.f32 %v806, %v806
          %v1037 = vmul.f32 %v807, %v807
          %v1038 = vmul.f32 %v808, %v808
          %v1039 = vmul.f32 %v809, %v809
          %v1040 = vadd.f32 %v1008, %v1009
          %v1041 = vadd.f32 %v1040, %v1010
          %v1042 = vadd.f32 %v1041, %v1011
          %v1043 = vadd.f32 %v1042, %v1012
          %v1044 = vadd.f32 %v1043, %v1013
          %v1045 = vadd.f32 %v1044, %v1014
          %v1046 = vadd.f32 %v1045, %v1015
          %v1047 = vadd.f32 %v1046, %v1016
          %v1048 = vadd.f32 %v1047, %v1017
          %v1049 = vadd.f32 %v1048, %v1018
          %v1050 = vadd.f32 %v1049, %v1019
          %v1051 = vadd.f32 %v1050, %v1020
          %v1052 = vadd.f32 %v1051, %v1021
          %v1053 = vadd.f32 %v1052, %v1022
          %v1054 = vadd.f32 %v1053, %v1023
          %v1055 = vadd.f32 %v1054, %v1024
          %v1056 = vadd.f32 %v1055, %v1025
          %v1057 = vadd.f32 %v1056, %v1026
          %v1058 = vadd.f32 %v1057, %v1027
          %v1059 = vadd.f32 %v1058, %v1028
          %v1060 = vadd.f32 %v1059, %v1029
          %v1061 = vadd.f32 %v1060, %v1030
          %v1062 = vadd.f32 %v1061, %v1031
          %v1063 = vadd.f32 %v1062, %v1032
          %v1064 = vadd.f32 %v1063, %v1033
          %v1065 = vadd.f32 %v1064, %v1034
          %v1066 = vadd.f32 %v1065, %v1035
          %v1067 = vadd.f32 %v1066, %v1036
          %v1068 = vadd.f32 %v1067, %v1037
          %v1069 = vadd.f32 %v1068, %v1038
          %v1070 = vadd.f32 %v1069, %v1039
          %v1071 = vrot.slane %v1070, 4
          %v1072 = vadd.f32 %v1070, %v1071
          %v1073 = vrot.slane %v1072, 2
          %v1074 = vadd.f32 %v1072, %v1073
          %v1075 = vrot.slane %v1074, 1
          %v1076 = vadd.f32 %v1074, %v1075
          %1077 = vst [vmem:[%s285] sm:$0x1] %v1076
        $region44: #{tpu_custom_call.1} parent=27 // pred_fallthru
          _
        %s1078 = sand.u32 %s111, 1
        %s1079 = scalar_lea.sflag [#allocation5], %s1078
        %s1080 = sand.u32 %s111, 1
        %s1081 = smul.addr %s1080, 128
        %s1082 = scalar_lea.vmem [#allocation8], %s1081
        %s1083 = sand.u32 %s26, 1
        %s1084 = scalar_lea.sflag [#allocation10], %s1083
        %s1085 = sand.u32 %s139, 1
        %s1086 = scalar_lea.vmem [#allocation9], %s1085
        %s1087 = sand.u32 %s26, 1
        %s1088 = scalar_lea.sflag [#allocation10], %s1087
        %s1089 = sand.u32 %s167, 1
        %s1090 = scalar_lea.vmem [#allocation11], %s1089
        // Predicated region
        $region45: #{tpu_custom_call.1} parent=27 // pred_check
          %p1091 = pneg %p121
        $region46: #{tpu_custom_call.1} parent=27 // pred_check_branch
          %1093 = sbr.rel (%p1091) target = $region48
        $region47: #{tpu_custom_call.1} parent=27 // pred_region
          %s1094 = smul.u32 32, %s31
          %s1096 = ssub.s32 2048, 2048
          %1097 = vsyncadd %s1079, %s1096
          %s1098 = sadd.s32 %s32, %s1094
          %s1099 = smul.addr %s1098, 64
          %s1100 = scalar_lea.hbm %s2, %s1099
          %s1101 = sshll.u32 %s1082, 4
          %s1102 = int_to_ptr.vmem [resolvable:$true] %s1101
          %1107 = dma.vmem_to_hbm [thread:$0]  %s1102, 2048, %s1100, %s1079, 64, 64, 4
        $region48: #{tpu_custom_call.1} parent=27 // pred_fallthru
          _
        // Predicated region
        $region49: #{tpu_custom_call.1} parent=27 // pred_check
          %p1108 = pneg %p149
        $region50: #{tpu_custom_call.1} parent=27 // pred_check_branch
          %1110 = sbr.rel (%p1108) target = $region52
        $region51: #{tpu_custom_call.1} parent=27 // pred_region
          %s1112 = ssub.s32 16, 16
          %1113 = vsyncadd %s1084, %s1112
          %s1114 = sadd.s32 %s32, %s31
          %s1115 = smul.addr %s1114, 16
          %s1116 = scalar_lea.hbm %s3, %s1115
          %s1118 = sshll.u32 %s1086, 4
          %s1119 = int_to_ptr.vmem [resolvable:$true] %s1118
          %1121 = dma.vmem_to_hbm [thread:$0]  %s1119, 16, %s1116, %s1084
        $region52: #{tpu_custom_call.1} parent=27 // pred_fallthru
          _
        // Predicated region
        $region53: #{tpu_custom_call.1} parent=27 // pred_check
          %p1122 = pneg %p177
        $region54: #{tpu_custom_call.1} parent=27 // pred_check_branch
          %1124 = sbr.rel (%p1122) target = $region56
        $region55: #{tpu_custom_call.1} parent=27 // pred_region
          %s1126 = ssub.s32 16, 16
          %1127 = vsyncadd %s1088, %s1126
          %s1128 = sadd.s32 %s32, %s31
          %s1129 = smul.addr %s1128, 16
          %s1130 = scalar_lea.hbm %s4, %s1129
          %s1132 = sshll.u32 %s1090, 4
          %s1133 = int_to_ptr.vmem [resolvable:$true] %s1132
          %1135 = dma.vmem_to_hbm [thread:$0]  %s1133, 16, %s1130, %s1088
        $region56: #{tpu_custom_call.1} parent=27 // pred_fallthru
          _
      $region28: #{tpu_custom_call.1} parent=5 // pred_fallthru
        _
      %p1136 = scmp.le.s32.totalorder 2, %s21
      // Predicated region
      $region57: #{tpu_custom_call.1} parent=5 // pred_check
        %p1137 = pneg %p1136
      $region58: #{tpu_custom_call.1} parent=5 // pred_check_branch
        %1139 = sbr.rel (%p1137) target = $region60
      $region59: #{tpu_custom_call.1} parent=5 // pred_region
        %s1140 = ssub.s32 %s21, 2
        // Predicated region
        $region61: #{tpu_custom_call.1} parent=59 // pred_check
          %p1141 = pneg %p127
        $region62: #{tpu_custom_call.1} parent=59 // pred_check_branch
          %1143 = sbr.rel (%p1141) target = $region64
        $region63: #{tpu_custom_call.1} parent=59 // pred_region
          %s1144 = sand.u32 %s112, 1
          %s1145 = scalar_lea.sflag [#allocation5], %s1144
          %s1146 = sand.u32 %s112, 1
          %s1147 = smul.addr %s1146, 128
          %s1148 = scalar_lea.vmem [#allocation8], %s1147
          %1149 = dma.done %s1145, 2048
        $region64: #{tpu_custom_call.1} parent=59 // pred_fallthru
          _
        // Predicated region
        $region65: #{tpu_custom_call.1} parent=59 // pred_check
          %p1150 = pneg %p155
        $region66: #{tpu_custom_call.1} parent=59 // pred_check_branch
          %1152 = sbr.rel (%p1150) target = $region68
        $region67: #{tpu_custom_call.1} parent=59 // pred_region
          %s1153 = sand.u32 %s27, 1
          %s1154 = scalar_lea.sflag [#allocation10], %s1153
          %s1155 = sand.u32 %s140, 1
          %s1156 = scalar_lea.vmem [#allocation9], %s1155
          %1157 = dma.done %s1154, 16
        $region68: #{tpu_custom_call.1} parent=59 // pred_fallthru
          _
        // Predicated region
        $region69: #{tpu_custom_call.1} parent=59 // pred_check
          %p1158 = pneg %p183
        $region70: #{tpu_custom_call.1} parent=59 // pred_check_branch
          %1160 = sbr.rel (%p1158) target = $region72
        $region71: #{tpu_custom_call.1} parent=59 // pred_region
          %s1161 = sand.u32 %s27, 1
          %s1162 = scalar_lea.sflag [#allocation10], %s1161
          %s1163 = sand.u32 %s168, 1
          %s1164 = scalar_lea.vmem [#allocation11], %s1163
          %1165 = dma.done %s1162, 16
        $region72: #{tpu_custom_call.1} parent=59 // pred_fallthru
          _
      $region60: #{tpu_custom_call.1} parent=5 // pred_fallthru
        _
    $region6: #{tpu_custom_call.1} parent=1 // loop_footer
      %s25 = sadd.s32 1, %s21
    $region7: #{tpu_custom_call.1} parent=1 // loop_footer_branch
      %20 = sbr.rel target = $region3
    $region8: #{tpu_custom_call.1} parent=1 // loop_exit
      _
    %1166 = vsyncpa [#allocation4], 1
    %s1167 = scalar_lea.sflag [#allocation4], 1
    %1168 = vsyncpa %s1167, 1
    %1169 = vsyncpa [#allocation7], 1
    %1170 = vsyncpa [#allocation5], 1
    %s1171 = scalar_lea.sflag [#allocation5], 1
    %1172 = vsyncpa %s1171, 1
    %1173 = vsyncpa [#allocation10], 1
    %s1174 = scalar_lea.sflag [#allocation10], 1
    %1175 = vsyncpa %s1174, 1

</llo_original>
